<compile_context>
chip_gen: v7x
topology: tpu7x:2x2x1
jax: 0.10.0
libtpu: 0.0.40
codegen_flags: <defaults>
</compile_context>

<pallas_src>
import math

import jax
import jax.numpy as jnp
from jax.experimental import pallas as pl
from jax.experimental.pallas import tpu as pltpu


def _laplacian_pe_kernel(x_ref, w_ref, b_ref, o_ref):
    # One tile of packed rows: (TILE_R, Kp) @ (Kp, Np) on the MXU, f32 accumulate.
    acc = jnp.dot(x_ref[...], w_ref[...], preferred_element_type=jnp.float32)
    # Bias buffer is (8, Np) (sublane-aligned, unmasked load); all rows identical.
    bias = b_ref[...][:1, :]
    o_ref[...] = (acc + bias).astype(o_ref.dtype)


def _round_up(x, m):
    return (x + m - 1) // m * m


def _choose_packing(lape_dim, embed_dim):
    """Pick (pack, e_pad): rows folded per kernel row, and padded embed dim.

    Goals: pack*e_pad % 128 == 0 (unmasked 128-lane stores), pack*lape_dim as
    close to 128 as possible (lane-dense contraction, no VMEM waste), kron
    weight kept small, pack <= 16.
    """
    e_pad = embed_dim
    base = 128 // math.gcd(e_pad, 128)  # min pack for a lane-dense output
    if base > 16:
        # embed_dim not a multiple of 8: pad <=7 zero columns instead of a huge
        # block-diagonal weight; keeps stores unmasked at small write overhead.
        e_pad = _round_up(embed_dim, 8)
        base = 128 // math.gcd(e_pad, 128)

    pack = base
    while True:
        cand = pack + base
        if cand > 16 or cand * lape_dim > 128:
            break
        if (cand * lape_dim) * (cand * e_pad) * 4 > (1 << 20):  # ~1 MiB kron cap
            break
        pack = cand

    if (pack * lape_dim) * (pack * e_pad) * 4 > (4 << 20):
        # Degenerate dims (huge lape_dim with awkward embed_dim): skip packing,
        # keep only a lane-dense (multiple-of-128) output.
        e_pad = _round_up(embed_dim, 128)
        pack = 1
    return pack, e_pad


def laplacian_pe(lap_mx, weight, bias, out_dtype=None):
    """lap_mx: (N, lape_dim), weight: (lape_dim, embed_dim), bias: (embed_dim,).

    Returns (1, 1, N, embed_dim), matching LaplacianPE.forward.
    Pass out_dtype=jnp.bfloat16 to cut HBM write traffic ~2x if numerics allow.
    """
    n, lape_dim = lap_mx.shape
    embed_dim = weight.shape[1]
    out_dtype = lap_mx.dtype if out_dtype is None else out_dtype
    out_itemsize = jnp.dtype(out_dtype).itemsize

    # ---- lane-dense packing / column padding ------------------------------
    pack, e_pad = _choose_packing(lape_dim, embed_dim)

    w_work, b_work = weight, bias
    if e_pad != embed_dim:
        w_work = jnp.pad(weight, ((0, 0), (0, e_pad - embed_dim)))
        b_work = jnp.pad(bias, (0, e_pad - embed_dim))

    kp = pack * lape_dim           # packed contraction dim (target: 128 lanes)
    np_ = pack * e_pad             # packed output lane dim (multiple of 128)

    # Row padding only to make the packing reshape legal (< pack rows, tiny).
    # allow_input_fusion below lets XLA fuse the pad/reshape into the call so x
    # does not get an extra HBM materialization pass.
    n_pad = _round_up(n, pack)
    x = lap_mx
    if n_pad != n:
        x = jnp.pad(x, ((0, n_pad - n), (0, 0)))
    r_pad = n_pad // pack
    x_packed = x.reshape(r_pad, kp)

    if pack > 1:
        # Block-diagonal weight: packed_out[r, p*E:(p+1)*E] = x[pack*r + p] @ W.
        w_big = jnp.kron(jnp.eye(pack, dtype=w_work.dtype), w_work)
        b_big = jnp.tile(b_work, pack)
    else:
        w_big = w_work
        b_big = b_work
    # (8, Np) bias buffer -> sublane-aligned, avoids a sublane-size-1 masked load.
    bias_buf = jnp.broadcast_to(b_big.reshape(1, np_), (8, np_))

    # ---- tile size over packed rows ---------------------------------------
    # ~8 MiB per grid step (input + output rows), so the ~0.35 us per-step fixed
    # cost is well amortized on v7x's ~3.2 TB/s HBM too. Double-buffered this is
    # ~16-20 MiB; vmem_limit_bytes is raised accordingly below.
    if r_pad <= 8:
        tile_r = r_pad                              # single full-extent block
    else:
        in_itemsize = x_packed.dtype.itemsize
        row_bytes = np_ * out_itemsize + _round_up(kp, 128) * in_itemsize
        tile_r = (8 << 20) // row_bytes
        # Keep >= ~8 grid steps when rows allow so the "parallel" axis can shard
        # across v7x's two TensorCores.
        min_steps = 8
        if r_pad >= min_steps * 8:
            tile_r = min(tile_r, (r_pad + min_steps - 1) // min_steps)
        tile_r = min(tile_r, r_pad)
        tile_r = max(8, tile_r // 8 * 8)

    grid = (pl.cdiv(r_pad, tile_r),)

    bytes_accessed = (
        x_packed.size * x_packed.dtype.itemsize
        + w_big.size * w_big.dtype.itemsize
        + bias_buf.size * bias_buf.dtype.itemsize
        + r_pad * np_ * out_itemsize
    )
    cost = pl.CostEstimate(
        flops=2 * n * lape_dim * embed_dim,
        transcendentals=0,
        bytes_accessed=int(bytes_accessed),
    )

    out = pl.pallas_call(
        _laplacian_pe_kernel,
        out_shape=jax.ShapeDtypeStruct((r_pad, np_), out_dtype),
        grid_spec=pltpu.PrefetchScalarGridSpec(
            num_scalar_prefetch=0,
            grid=grid,
            in_specs=[
                pl.BlockSpec((tile_r, kp), lambda i: (i, 0)),   # streamed row tiles
                pl.BlockSpec((kp, np_), lambda i: (0, 0)),      # weight: VMEM-resident
                pl.BlockSpec((8, np_), lambda i: (0, 0)),       # bias:   VMEM-resident
            ],
            out_specs=pl.BlockSpec((tile_r, np_), lambda i: (i, 0)),
        ),
        compiler_params=pltpu.CompilerParams(
            dimension_semantics=("parallel",),        # rows independent -> megacore
            vmem_limit_bytes=48 * 1024 * 1024,        # fits v5e/v6e easily; headroom on v7x
            allow_input_fusion=[True, False, False],  # fuse pad/reshape of x into the call
        ),
        cost_estimate=cost,
    )(x_packed, w_big, bias_buf)

    # Unpack, drop padded rows/columns, then unsqueeze(0).unsqueeze(0).
    out = out.reshape(n_pad, e_pad)[:n, :embed_dim]
    return out.reshape(1, 1, n, embed_dim)


def init_params(key, lape_dim, embed_dim, dtype=jnp.float32):
    """Deterministic init mimicking nn.Linear defaults (uniform +/- 1/sqrt(fan_in))."""
    k_w, k_b = jax.random.split(key)
    bound = 1.0 / jnp.sqrt(jnp.asarray(lape_dim, dtype))
    # Stored already transposed to (lape_dim, embed_dim) for x @ W.
    weight = jax.random.uniform(k_w, (lape_dim, embed_dim), dtype, -bound, bound)
    bias = jax.random.uniform(k_b, (embed_dim,), dtype, -bound, bound)
    return weight, bias


if __name__ == "__main__":
    key = jax.random.PRNGKey(0)
    k_x, k_p = jax.random.split(key)

    lape_dim = 8      # number of Laplacian eigenvectors used as PE
    embed_dim = 32    # model embedding dim
    num_nodes = 16    # graph nodes

    lap_mx = jax.random.normal(k_x, (num_nodes, lape_dim), jnp.float32)
    weight, bias = init_params(k_p, lape_dim, embed_dim)

    out = laplacian_pe(lap_mx, weight, bias)
    out = jax.block_until_ready(out)

    # Reference check against plain JAX (same semantics as the PyTorch module).
    ref = (lap_mx @ weight + bias).reshape(1, 1, num_nodes, embed_dim)
    assert out.shape == (1, 1, num_nodes, embed_dim)
    assert jnp.allclose(out, ref, atol=1e-5, rtol=1e-5)

    print("KERNEL_OK")
</pallas_src>

<mosaic_0001>
module attributes {stable_mosaic.version = 11 : i64} {
  func.func @_laplacian_pe_kernel(%arg0: i32, %arg1: memref<1x128xf32, #tpu.memory_space<vmem>>, %arg2: memref<128x512xf32, #tpu.memory_space<vmem>>, %arg3: memref<8x512xf32, #tpu.memory_space<vmem>>, %arg4: memref<1x512xf32, #tpu.memory_space<vmem>>) attributes {dimension_semantics = [#tpu.dimension_semantics<parallel>], iteration_bounds = array<i64: 1>, scalar_prefetch = 0 : i64, scratch_operands = 0 : i64, tpu.core_type = #tpu.core_type<tc>, window_params = [{transform_indices = @transform_0, window_bounds = array<i64: 1, 128>}, {pipeline_mode = #tpu.pipeline_mode<synchronous>, transform_indices = @transform_1, window_bounds = array<i64: 128, 512>}, {pipeline_mode = #tpu.pipeline_mode<synchronous>, transform_indices = @transform_2, window_bounds = array<i64: 8, 512>}, {transform_indices = @transform_3, window_bounds = array<i64: 1, 512>}]} {
    %c0 = arith.constant 0 : index
    %c0_0 = arith.constant 0 : index
    %0 = vector.load %arg1[%c0, %c0_0] : memref<1x128xf32, #tpu.memory_space<vmem>>, vector<1x128xf32>
    %c0_1 = arith.constant 0 : index
    %c0_2 = arith.constant 0 : index
    %1 = vector.load %arg2[%c0_1, %c0_2] : memref<128x512xf32, #tpu.memory_space<vmem>>, vector<128x512xf32>
    %cst = arith.constant dense<0.000000e+00> : vector<1x512xf32>
    %2 = tpu.matmul %0, %1, %cst {dimension_numbers = #tpu.dot_dimension_numbers<[1], [0], [0], [1], [0, 0, 1, 1], [], []>} : vector<1x128xf32>, vector<128x512xf32>, vector<1x512xf32> -> vector<1x512xf32>
    %c0_3 = arith.constant 0 : index
    %c0_4 = arith.constant 0 : index
    %3 = vector.load %arg3[%c0_3, %c0_4] : memref<8x512xf32, #tpu.memory_space<vmem>>, vector<8x512xf32>
    %4 = vector.extract_strided_slice %3 {offsets = [0, 0], sizes = [1, 512], strides = [1, 1]} : vector<8x512xf32> to vector<1x512xf32>
    %5 = arith.addf %2, %4 : vector<1x512xf32>
    %c0_5 = arith.constant 0 : index
    %c0_6 = arith.constant 0 : index
    %6 = vector.load %arg4[%c0_5, %c0_6] : memref<1x512xf32, #tpu.memory_space<vmem>>, vector<1x512xf32>
    tpu.vector_store %arg4[%c0_5, %c0_6], %5 {strides = array<i32>} : memref<1x512xf32, #tpu.memory_space<vmem>>, vector<1x512xf32>,
    return
  }
  func.func @transform_0(%arg0: i32) -> (i32, i32) {
    %c0_i32 = arith.constant 0 : i32
    %c0_i32_0 = arith.constant 0 : i32
    return %arg0, %c0_i32 : i32, i32
  }
  func.func @transform_1(%arg0: i32) -> (i32, i32) {
    %c0_i32 = arith.constant 0 : i32
    %c0_i32_0 = arith.constant 0 : i32
    %c0_i32_1 = arith.constant 0 : i32
    return %c0_i32, %c0_i32_0 : i32, i32
  }
  func.func @transform_2(%arg0: i32) -> (i32, i32) {
    %c0_i32 = arith.constant 0 : i32
    %c0_i32_0 = arith.constant 0 : i32
    %c0_i32_1 = arith.constant 0 : i32
    return %c0_i32, %c0_i32_0 : i32, i32
  }
  func.func @transform_3(%arg0: i32) -> (i32, i32) {
    %c0_i32 = arith.constant 0 : i32
    %c0_i32_0 = arith.constant 0 : i32
    return %arg0, %c0_i32 : i32, i32
  }
}

</mosaic_0001>

<llo_original>
// kernel: tpu_custom_call.1
$region0: #{tpu_custom_call.1}
  #allocation0 [shape = 'u32[]', space=smem, size = 0x4, offset = 0x4, fixed_abs, tag = 'smem constant byte address 0x4 - core index']
  #allocation1 [shape = 'u32[144,128]{1,0:T(1,128)}', space=vmem, size = 0x12000, scoped, tag = 'internal scratch']
  %s0 = inlined_call_operand.hbm [shape: f32[1,128], index: 0, kind: input, shape index: {}]
  %s1 = inlined_call_operand.hbm [shape: f32[128,512], index: 1, kind: input, shape index: {}]
  %s2 = inlined_call_operand.hbm [shape: f32[8,512], index: 2, kind: input, shape index: {}]
  %s3 = inlined_call_operand.hbm [shape: f32[1,512], index: 3, kind: output, shape index: {}]
  %s4 = sld [smem:[#allocation0]]
  $region34: #{tpu_custom_call.1} parent=0
    _
  %s6 = ssub.s32 1, %s4
  %s7 = scalar_select 0, %s6, %s4
  $region1: #{tpu_custom_call.1} parent=0
    #allocation2 [shape = 'u8[512]{0}', space=vmem, size = 0x400, scoped, tag = 'input window, operand 0, single buffered']
    #allocation3 [shape = 's32[1]{0}', space=sflag, size = 0x4, scoped, tag = 'scoped memory for tpu_custom_call.1']
    #allocation4 [shape = 's32[1]{0}', space=sflag, size = 0x4, scoped, tag = 'scoped memory for tpu_custom_call.1']
    #allocation5 [shape = 'u8[262144]{0}', space=vmem, size = 0x40000, scoped, tag = 'input window, operand 1, single buffered']
    #allocation6 [shape = 's32[1]{0}', space=sflag, size = 0x4, scoped, tag = 'scoped memory for tpu_custom_call.1']
    #allocation7 [shape = 'u8[16384]{0}', space=vmem, size = 0x4000, scoped, tag = 'input window, operand 2, single buffered']
    #allocation8 [shape = 'u8[2048]{0}', space=vmem, size = 0x800, scoped, tag = 'output window, operand 0, single buffered']
    %8 = vsyncpa [#allocation3], 0
    %9 = vsyncpa [#allocation6], 0
    %10 = vsyncpa [#allocation4], 0
    // Predicated region
    $region2: #{tpu_custom_call.1} parent=1 // pred_check
      _
    $region3: #{tpu_custom_call.1} parent=1 // pred_check_branch
      %12 = sbr.rel (0) target = $region5
    $region4: #{tpu_custom_call.1} parent=1 // pred_region
      %s14 = ssub.s32 16, 16
      %15 = vsyncadd [#allocation3], %s14
      %s17 = sshll.u32 [#allocation2], 4
      %s18 = int_to_ptr.vmem [resolvable:$true] %s17
      %20 = dma.hbm_to_vmem [thread:$0]  %s0, 16, %s18, [#allocation3]
    $region5: #{tpu_custom_call.1} parent=1 // pred_fallthru
      _
    // Predicated region
    $region6: #{tpu_custom_call.1} parent=1 // pred_check
      _
    $region7: #{tpu_custom_call.1} parent=1 // pred_check_branch
      %22 = sbr.rel (0) target = $region9
    $region8: #{tpu_custom_call.1} parent=1 // pred_region
      %s24 = ssub.s32 8192, 8192
      %25 = vsyncadd [#allocation6], %s24
      %s26 = sshll.u32 [#allocation5], 4
      %s27 = int_to_ptr.vmem [resolvable:$true] %s26
      %32 = dma.hbm_to_vmem [thread:$0]  %s1, 8192, %s27, [#allocation6], 512, 512, 32
    $region9: #{tpu_custom_call.1} parent=1 // pred_fallthru
      _
    // Predicated region
    $region10: #{tpu_custom_call.1} parent=1 // pred_check
      _
    $region11: #{tpu_custom_call.1} parent=1 // pred_check_branch
      %34 = sbr.rel (0) target = $region13
    $region12: #{tpu_custom_call.1} parent=1 // pred_region
      %s36 = ssub.s32 512, 512
      %37 = vsyncadd [#allocation6], %s36
      %s39 = sshll.u32 [#allocation7], 4
      %s40 = int_to_ptr.vmem [resolvable:$true] %s39
      %42 = dma.hbm_to_vmem [thread:$0]  %s2, 512, %s40, [#allocation6]
    $region13: #{tpu_custom_call.1} parent=1 // pred_fallthru
      _
    // Predicated region
    $region14: #{tpu_custom_call.1} parent=1 // pred_check
      _
    $region15: #{tpu_custom_call.1} parent=1 // pred_check_branch
      %44 = sbr.rel (0) target = $region17
    $region16: #{tpu_custom_call.1} parent=1 // pred_region
      %45 = dma.done [#allocation3], 16
    $region17: #{tpu_custom_call.1} parent=1 // pred_fallthru
      _
    // Predicated region
    $region18: #{tpu_custom_call.1} parent=1 // pred_check
      _
    $region19: #{tpu_custom_call.1} parent=1 // pred_check_branch
      %47 = sbr.rel (0) target = $region21
    $region20: #{tpu_custom_call.1} parent=1 // pred_region
      %48 = dma.done [#allocation6], 8192
    $region21: #{tpu_custom_call.1} parent=1 // pred_fallthru
      _
    // Predicated region
    $region22: #{tpu_custom_call.1} parent=1 // pred_check
      _
    $region23: #{tpu_custom_call.1} parent=1 // pred_check_branch
      %50 = sbr.rel (0) target = $region25
    $region24: #{tpu_custom_call.1} parent=1 // pred_region
      %51 = dma.done [#allocation6], 512
    $region25: #{tpu_custom_call.1} parent=1 // pred_fallthru
      _
    %v52 = vld [vmem:[#allocation2] sm:$0x1]
    %v53 = vld [vmem:[#allocation5] sm:$0xff]
    %v54 = vld [vmem:[#allocation5 + $0x8] sm:$0xff]
    %v55 = vld [vmem:[#allocation5 + $0x10] sm:$0xff]
    %v56 = vld [vmem:[#allocation5 + $0x18] sm:$0xff]
    %v57 = vld [vmem:[#allocation5 + $0x20] sm:$0xff]
    %v58 = vld [vmem:[#allocation5 + $0x28] sm:$0xff]
    %v59 = vld [vmem:[#allocation5 + $0x30] sm:$0xff]
    %v60 = vld [vmem:[#allocation5 + $0x38] sm:$0xff]
    %v61 = vld [vmem:[#allocation5 + $0x40] sm:$0xff]
    %v62 = vld [vmem:[#allocation5 + $0x48] sm:$0xff]
    %v63 = vld [vmem:[#allocation5 + $0x50] sm:$0xff]
    %v64 = vld [vmem:[#allocation5 + $0x58] sm:$0xff]
    %v65 = vld [vmem:[#allocation5 + $0x60] sm:$0xff]
    %v66 = vld [vmem:[#allocation5 + $0x68] sm:$0xff]
    %v67 = vld [vmem:[#allocation5 + $0x70] sm:$0xff]
    %v68 = vld [vmem:[#allocation5 + $0x78] sm:$0xff]
    %v69 = vld [vmem:[#allocation5 + $0x80] sm:$0xff]
    %v70 = vld [vmem:[#allocation5 + $0x88] sm:$0xff]
    %v71 = vld [vmem:[#allocation5 + $0x90] sm:$0xff]
    %v72 = vld [vmem:[#allocation5 + $0x98] sm:$0xff]
    %v73 = vld [vmem:[#allocation5 + $0xa0] sm:$0xff]
    %v74 = vld [vmem:[#allocation5 + $0xa8] sm:$0xff]
    %v75 = vld [vmem:[#allocation5 + $0xb0] sm:$0xff]
    %v76 = vld [vmem:[#allocation5 + $0xb8] sm:$0xff]
    %v77 = vld [vmem:[#allocation5 + $0xc0] sm:$0xff]
    %v78 = vld [vmem:[#allocation5 + $0xc8] sm:$0xff]
    %v79 = vld [vmem:[#allocation5 + $0xd0] sm:$0xff]
    %v80 = vld [vmem:[#allocation5 + $0xd8] sm:$0xff]
    %v81 = vld [vmem:[#allocation5 + $0xe0] sm:$0xff]
    %v82 = vld [vmem:[#allocation5 + $0xe8] sm:$0xff]
    %v83 = vld [vmem:[#allocation5 + $0xf0] sm:$0xff]
    %v84 = vld [vmem:[#allocation5 + $0xf8] sm:$0xff]
    %v85 = vld [vmem:[#allocation5 + $0x100] sm:$0xff]
    %v86 = vld [vmem:[#allocation5 + $0x108] sm:$0xff]
    %v87 = vld [vmem:[#allocation5 + $0x110] sm:$0xff]
    %v88 = vld [vmem:[#allocation5 + $0x118] sm:$0xff]
    %v89 = vld [vmem:[#allocation5 + $0x120] sm:$0xff]
    %v90 = vld [vmem:[#allocation5 + $0x128] sm:$0xff]
    %v91 = vld [vmem:[#allocation5 + $0x130] sm:$0xff]
    %v92 = vld [vmem:[#allocation5 + $0x138] sm:$0xff]
    %v93 = vld [vmem:[#allocation5 + $0x140] sm:$0xff]
    %v94 = vld [vmem:[#allocation5 + $0x148] sm:$0xff]
    %v95 = vld [vmem:[#allocation5 + $0x150] sm:$0xff]
    %v96 = vld [vmem:[#allocation5 + $0x158] sm:$0xff]
    %v97 = vld [vmem:[#allocation5 + $0x160] sm:$0xff]
    %v98 = vld [vmem:[#allocation5 + $0x168] sm:$0xff]
    %v99 = vld [vmem:[#allocation5 + $0x170] sm:$0xff]
    %v100 = vld [vmem:[#allocation5 + $0x178] sm:$0xff]
    %v101 = vld [vmem:[#allocation5 + $0x180] sm:$0xff]
    %v102 = vld [vmem:[#allocation5 + $0x188] sm:$0xff]
    %v103 = vld [vmem:[#allocation5 + $0x190] sm:$0xff]
    %v104 = vld [vmem:[#allocation5 + $0x198] sm:$0xff]
    %v105 = vld [vmem:[#allocation5 + $0x1a0] sm:$0xff]
    %v106 = vld [vmem:[#allocation5 + $0x1a8] sm:$0xff]
    %v107 = vld [vmem:[#allocation5 + $0x1b0] sm:$0xff]
    %v108 = vld [vmem:[#allocation5 + $0x1b8] sm:$0xff]
    %v109 = vld [vmem:[#allocation5 + $0x1c0] sm:$0xff]
    %v110 = vld [vmem:[#allocation5 + $0x1c8] sm:$0xff]
    %v111 = vld [vmem:[#allocation5 + $0x1d0] sm:$0xff]
    %v112 = vld [vmem:[#allocation5 + $0x1d8] sm:$0xff]
    %v113 = vld [vmem:[#allocation5 + $0x1e0] sm:$0xff]
    %v114 = vld [vmem:[#allocation5 + $0x1e8] sm:$0xff]
    %v115 = vld [vmem:[#allocation5 + $0x1f0] sm:$0xff]
    %v116 = vld [vmem:[#allocation5 + $0x1f8] sm:$0xff]
    %v117 = vld [vmem:[#allocation7] sm:$0xff]
    %v118 = vld [vmem:[#allocation7 + $0x8] sm:$0xff]
    %v119 = vld [vmem:[#allocation7 + $0x10] sm:$0xff]
    %v120 = vld [vmem:[#allocation7 + $0x18] sm:$0xff]
    %121 = vmatprep.subr.mxu0 %v54
    %122 = vmatpush1.msra.mxu0 %v53
    %123 = vmatprep.subr.mxu0 %v58
    %124 = vmatpush1.msra.mxu0 %v57
    %125 = vmatprep.subr.mxu0 %v62
    %126 = vmatpush1.msra.mxu0 %v61
    %127 = vmatprep.subr.mxu0 %v66
    %128 = vmatpush1.msra.mxu0 %v65
    %129 = vmatprep.subr.mxu0 %v70
    %130 = vmatpush1.msra.mxu0 %v69
    %131 = vmatprep.subr.mxu0 %v74
    %132 = vmatpush1.msra.mxu0 %v73
    %133 = vmatprep.subr.mxu0 %v78
    %134 = vmatpush1.msra.mxu0 %v77
    %135 = vmatprep.subr.mxu0 %v82
    %136 = vmatpush1.msra.mxu0 %v81
    %137 = vmatprep.subr.mxu0 %v86
    %138 = vmatpush1.msra.mxu0 %v85
    %139 = vmatprep.subr.mxu0 %v90
    %140 = vmatpush1.msra.mxu0 %v89
    %141 = vmatprep.subr.mxu0 %v94
    %142 = vmatpush1.msra.mxu0 %v93
    %143 = vmatprep.subr.mxu0 %v98
    %144 = vmatpush1.msra.mxu0 %v97
    %145 = vmatprep.subr.mxu0 %v102
    %146 = vmatpush1.msra.mxu0 %v101
    %147 = vmatprep.subr.mxu0 %v106
    %148 = vmatpush1.msra.mxu0 %v105
    %149 = vmatprep.subr.mxu0 %v110
    %150 = vmatpush1.msra.mxu0 %v109
    %151 = vmatprep.subr.mxu0 %v114
    %152 = vmatpush1.msra.mxu0 %v113
    %153 = vmatprep.subr.mxu0 0.0
    %154 = vmatpush1.msra.mxu0 0.0
    %155 = vmatprep.subr.mxu0 0.0
    %156 = vmatpush1.msra.mxu0 0.0
    %157 = vmatprep.subr.mxu0 0.0
    %158 = vmatpush1.msra.mxu0 0.0
    %159 = vmatprep.subr.mxu0 0.0
    %160 = vmatpush1.msra.mxu0 0.0
    %161 = vmatprep.subr.mxu0 0.0
    %162 = vmatpush1.msra.mxu0 0.0
    %163 = vmatprep.subr.mxu0 0.0
    %164 = vmatpush1.msra.mxu0 0.0
    %165 = vmatprep.subr.mxu0 0.0
    %166 = vmatpush1.msra.mxu0 0.0
    %167 = vmatprep.subr.mxu0 0.0
    %168 = vmatpush1.msra.mxu0 0.0
    %169 = vmatprep.subr.mxu0 0.0
    %170 = vmatpush1.msra.mxu0 0.0
    %171 = vmatprep.subr.mxu0 0.0
    %172 = vmatpush1.msra.mxu0 0.0
    %173 = vmatprep.subr.mxu0 0.0
    %174 = vmatpush1.msra.mxu0 0.0
    %175 = vmatprep.subr.mxu0 0.0
    %176 = vmatpush1.msra.mxu0 0.0
    %177 = vmatprep.subr.mxu0 0.0
    %178 = vmatpush1.msra.mxu0 0.0
    %179 = vmatprep.subr.mxu0 0.0
    %180 = vmatpush1.msra.mxu0 0.0
    %181 = vmatprep.subr.mxu0 0.0
    %182 = vmatpush1.msra.mxu0 0.0
    %183 = vmatprep.subr.mxu0 0.0
    %184 = vmatpush1.msra.mxu0 0.0
    %185 = vmatprep.mubr.f32.mxu0 0.0
    %186 = vmatmul.mubr.f32.gmra.mrb[0].mxu0 %v52
    %v187 = vpop.f32.mrb[0].mxu0
    %v188 = vadd.f32 %v117, %v187
    %v189 = vpop.f32.mrb[0].mxu0
    %v190 = vadd.f32 %v118, %v189
    %191 = vdwg.mxu0
    %192 = vmatprep.subr.mxu0 %v56
    %193 = vmatpush1.msra.mxu0 %v55
    %194 = vmatprep.subr.mxu0 %v60
    %195 = vmatpush1.msra.mxu0 %v59
    %196 = vmatprep.subr.mxu0 %v64
    %197 = vmatpush1.msra.mxu0 %v63
    %198 = vmatprep.subr.mxu0 %v68
    %199 = vmatpush1.msra.mxu0 %v67
    %200 = vmatprep.subr.mxu0 %v72
    %201 = vmatpush1.msra.mxu0 %v71
    %202 = vmatprep.subr.mxu0 %v76
    %203 = vmatpush1.msra.mxu0 %v75
    %204 = vmatprep.subr.mxu0 %v80
    %205 = vmatpush1.msra.mxu0 %v79
    %206 = vmatprep.subr.mxu0 %v84
    %207 = vmatpush1.msra.mxu0 %v83
    %208 = vmatprep.subr.mxu0 %v88
    %209 = vmatpush1.msra.mxu0 %v87
    %210 = vmatprep.subr.mxu0 %v92
    %211 = vmatpush1.msra.mxu0 %v91
    %212 = vmatprep.subr.mxu0 %v96
    %213 = vmatpush1.msra.mxu0 %v95
    %214 = vmatprep.subr.mxu0 %v100
    %215 = vmatpush1.msra.mxu0 %v99
    %216 = vmatprep.subr.mxu0 %v104
    %217 = vmatpush1.msra.mxu0 %v103
    %218 = vmatprep.subr.mxu0 %v108
    %219 = vmatpush1.msra.mxu0 %v107
    %220 = vmatprep.subr.mxu0 %v112
    %221 = vmatpush1.msra.mxu0 %v111
    %222 = vmatprep.subr.mxu0 %v116
    %223 = vmatpush1.msra.mxu0 %v115
    %224 = vmatprep.subr.mxu0 0.0
    %225 = vmatpush1.msra.mxu0 0.0
    %226 = vmatprep.subr.mxu0 0.0
    %227 = vmatpush1.msra.mxu0 0.0
    %228 = vmatprep.subr.mxu0 0.0
    %229 = vmatpush1.msra.mxu0 0.0
    %230 = vmatprep.subr.mxu0 0.0
    %231 = vmatpush1.msra.mxu0 0.0
    %232 = vmatprep.subr.mxu0 0.0
    %233 = vmatpush1.msra.mxu0 0.0
    %234 = vmatprep.subr.mxu0 0.0
    %235 = vmatpush1.msra.mxu0 0.0
    %236 = vmatprep.subr.mxu0 0.0
    %237 = vmatpush1.msra.mxu0 0.0
    %238 = vmatprep.subr.mxu0 0.0
    %239 = vmatpush1.msra.mxu0 0.0
    %240 = vmatprep.subr.mxu0 0.0
    %241 = vmatpush1.msra.mxu0 0.0
    %242 = vmatprep.subr.mxu0 0.0
    %243 = vmatpush1.msra.mxu0 0.0
    %244 = vmatprep.subr.mxu0 0.0
    %245 = vmatpush1.msra.mxu0 0.0
    %246 = vmatprep.subr.mxu0 0.0
    %247 = vmatpush1.msra.mxu0 0.0
    %248 = vmatprep.subr.mxu0 0.0
    %249 = vmatpush1.msra.mxu0 0.0
    %250 = vmatprep.subr.mxu0 0.0
    %251 = vmatpush1.msra.mxu0 0.0
    %252 = vmatprep.subr.mxu0 0.0
    %253 = vmatpush1.msra.mxu0 0.0
    %254 = vmatprep.subr.mxu0 0.0
    %255 = vmatpush1.msra.mxu0 0.0
    %256 = vmatprep.mubr.f32.mxu0 0.0
    %257 = vmatmul.mubr.f32.gmra.mrb[0].mxu0 %v52
    %v258 = vpop.f32.mrb[0].mxu0
    %v259 = vadd.f32 %v119, %v258
    %v260 = vpop.f32.mrb[0].mxu0
    %v261 = vadd.f32 %v120, %v260
    %262 = vdwg.mxu0
    %v267 = vcombine.low %v188, %v190
    %v268 = vcombine.low %v259, %v261
    %v270 = vunpack.c.l.s4 1966171168
    %v271 = vunpack.c.0.s8 %v270
    %v272 = vlaneseq
    %v273 = vshrl.u32 %v272, 7
    %v274 = vsub.s32 %v271, %v273
    %v275 = vrot.slane %v267, %v274
    %v277 = vunpack.c.l.s4 1966171168
    %v278 = vunpack.c.0.s8 %v277
    %v279 = vlaneseq
    %v280 = vshrl.u32 %v279, 7
    %v281 = vsub.s32 %v278, %v280
    %v282 = vrot.slane %v268, %v281
    %v283 = vcombine.low %v275, %v282
    %v285 = vunpack.c.l.s4 1966171168
    %v286 = vunpack.c.0.s8 %v285
    %v287 = vlaneseq
    %v288 = vshrl.u32 %v287, 7
    %v289 = vsub.s32 %v286, %v288
    %v290 = vrot.slane %v283, %v289
    %v292 = vlaneseq
    %vm293 = vcmp.ge.s32.totalorder %v292, 0
    %vm294 = vcmp.lt.s32.totalorder %v292, 512
    %vm295 = vmand %vm293, %vm294
    %296 = vst.msk [vmem:[#allocation8] sm:$0xf] %vm295, %v290
    // Predicated region
    $region26: #{tpu_custom_call.1} parent=1 // pred_check
      _
    $region27: #{tpu_custom_call.1} parent=1 // pred_check_branch
      %298 = sbr.rel (0) target = $region29
    $region28: #{tpu_custom_call.1} parent=1 // pred_region
      %s300 = ssub.s32 64, 64
      %301 = vsyncadd [#allocation4], %s300
      %s303 = sshll.u32 [#allocation8], 4
      %s304 = int_to_ptr.vmem [resolvable:$true] %s303
      %306 = dma.vmem_to_hbm [thread:$0]  %s304, 64, %s3, [#allocation4]
    $region29: #{tpu_custom_call.1} parent=1 // pred_fallthru
      _
    // Predicated region
    $region30: #{tpu_custom_call.1} parent=1 // pred_check
      _
    $region31: #{tpu_custom_call.1} parent=1 // pred_check_branch
      %308 = sbr.rel (0) target = $region33
    $region32: #{tpu_custom_call.1} parent=1 // pred_region
      %309 = dma.done [#allocation4], 64
    $region33: #{tpu_custom_call.1} parent=1 // pred_fallthru
      _
    %310 = vsyncpa [#allocation3], 1
    %311 = vsyncpa [#allocation6], 1
    %312 = vsyncpa [#allocation4], 1

</llo_original>
